<compile_context>
chip_gen: v7x
topology: tpu7x:2x2x1
jax: 0.10.0
libtpu: 0.0.40
codegen_flags: <defaults>
</compile_context>

<pallas_src>
import math
from functools import partial

import jax
import jax.numpy as jnp
from jax.experimental import pallas as pl
from jax.experimental.pallas import tpu as pltpu


def _kernel_flat(x_ref, freq_ref, out_ref):
    # x_ref: (TILE_B, 1)  freq_ref: (1, half_dim)  out_ref: (TILE_B, dim)
    half_dim = freq_ref.shape[1]
    emb = x_ref[...] * freq_ref[...]            # (TILE_B, half_dim), VPU (free under EUP)
    out_ref[:, :half_dim] = jnp.sin(emb)        # lane offset 0
    out_ref[:, half_dim:] = jnp.cos(emb)        # lane offset half_dim (128-aligned path only)


def _kernel_split(x_ref, freq_ref, out_ref):
    # x_ref: (TILE_B, 1)  freq_ref: (1, half_dim)  out_ref: (TILE_B, 2, half_dim)
    emb = x_ref[...] * freq_ref[...]            # (TILE_B, half_dim)
    out_ref[:, 0, :] = jnp.sin(emb)             # both planes stored at lane offset 0
    out_ref[:, 1, :] = jnp.cos(emb)


@partial(jax.jit, static_argnames=("dim", "tile_b"))
def sinusoidal_pos_emb(x: jax.Array, dim: int, tile_b: int = 512) -> jax.Array:
    """x: (B,) positions/timesteps. Returns (B, dim) float32, layout [sin | cos]."""
    assert dim % 2 == 0 and dim >= 4, "dim must be even and >= 4 (half_dim - 1 > 0)"
    half_dim = dim // 2
    b = x.shape[0]

    # Tile size: multiple of 8 sublanes, no larger than the padded batch.
    tile_b = max(8, min(tile_b, pl.cdiv(b, 8) * 8))
    b_pad = pl.cdiv(b, tile_b) * tile_b
    grid = (b_pad // tile_b,)

    # Parameter-free frequency table (deterministic glue, built once).
    scale = math.log(10000.0) / (half_dim - 1)
    freqs = jnp.exp(jnp.arange(half_dim, dtype=jnp.float32) * -scale)
    f2d = freqs.reshape(1, half_dim)

    x2d = jnp.pad(x.astype(jnp.float32), (0, b_pad - b)).reshape(b_pad, 1)

    in_specs = [
        pl.BlockSpec((tile_b, 1), lambda i: (i, 0)),       # batch tile of positions
        pl.BlockSpec((1, half_dim), lambda i: (0, 0)),     # freqs: VMEM-resident
    ]
    compiler_params = pltpu.CompilerParams(dimension_semantics=("parallel",))

    if half_dim % 128 == 0:
        # Both slice stores are already lane-aligned; use flat layout directly.
        out = pl.pallas_call(
            _kernel_flat,
            out_shape=jax.ShapeDtypeStruct((b_pad, dim), jnp.float32),
            grid=grid,
            in_specs=in_specs,
            out_specs=pl.BlockSpec((tile_b, dim), lambda i: (i, 0)),
            compiler_params=compiler_params,
        )(x2d, f2d)
        return out[:b]
    else:
        # Lane-dense (B, 2, half_dim) layout; row-major reshape == torch concat.
        out3 = pl.pallas_call(
            _kernel_split,
            out_shape=jax.ShapeDtypeStruct((b_pad, 2, half_dim), jnp.float32),
            grid=grid,
            in_specs=in_specs,
            out_specs=pl.BlockSpec((tile_b, 2, half_dim), lambda i: (i, 0, 0)),
            compiler_params=compiler_params,
        )(x2d, f2d)
        return out3.reshape(b_pad, dim)[:b]


def _reference(x: jax.Array, dim: int) -> jax.Array:
    half_dim = dim // 2
    scale = math.log(10000.0) / (half_dim - 1)
    freqs = jnp.exp(jnp.arange(half_dim, dtype=jnp.float32) * -scale)
    emb = x.astype(jnp.float32)[:, None] * freqs[None, :]
    return jnp.concatenate([jnp.sin(emb), jnp.cos(emb)], axis=-1)


if __name__ == "__main__":
    key = jax.random.PRNGKey(0)

    # Small shapes consistent with the module (diffusion timesteps -> embedding).
    dim = 32
    batch = 8
    x = jax.random.uniform(key, (batch,), dtype=jnp.float32, minval=0.0, maxval=1000.0)

    out = jax.block_until_ready(sinusoidal_pos_emb(x, dim))
    ref = _reference(x, dim)
    assert out.shape == (batch, dim)
    assert jnp.allclose(out, ref, atol=1e-5, rtol=1e-5), "mismatch vs reference (unaligned path)"

    # Also exercise the 128-aligned flat-layout path with an uneven batch.
    dim2 = 256
    batch2 = 13
    x2 = jax.random.uniform(jax.random.PRNGKey(1), (batch2,), dtype=jnp.float32,
                            minval=0.0, maxval=1000.0)
    out2 = jax.block_until_ready(sinusoidal_pos_emb(x2, dim2, tile_b=64))
    ref2 = _reference(x2, dim2)
    assert out2.shape == (batch2, dim2)
    assert jnp.allclose(out2, ref2, atol=1e-5, rtol=1e-5), "mismatch vs reference (aligned path)"

    print("KERNEL_OK")
</pallas_src>

<mosaic_0001>
module attributes {stable_mosaic.version = 11 : i64} {
  func.func @_kernel_split(%arg0: i32, %arg1: memref<8x1xf32, #tpu.memory_space<vmem>>, %arg2: memref<1x16xf32, #tpu.memory_space<vmem>>, %arg3: memref<8x2x16xf32, #tpu.memory_space<vmem>>) attributes {dimension_semantics = [#tpu.dimension_semantics<parallel>], iteration_bounds = array<i64: 1>, scalar_prefetch = 0 : i64, scratch_operands = 0 : i64, tpu.core_type = #tpu.core_type<tc>, window_params = [{transform_indices = @transform_0, window_bounds = array<i64: 8, 1>}, {pipeline_mode = #tpu.pipeline_mode<synchronous>, transform_indices = @transform_1, window_bounds = array<i64: 1, 16>}, {transform_indices = @transform_2, window_bounds = array<i64: 8, 2, 16>}]} {
    %c0 = arith.constant 0 : index
    %c0_0 = arith.constant 0 : index
    %0 = vector.load %arg1[%c0, %c0_0] : memref<8x1xf32, #tpu.memory_space<vmem>>, vector<8x1xf32>
    %c0_1 = arith.constant 0 : index
    %c0_2 = arith.constant 0 : index
    %1 = vector.load %arg2[%c0_1, %c0_2] : memref<1x16xf32, #tpu.memory_space<vmem>>, vector<1x16xf32>
    %2 = vector.broadcast %0 : vector<8x1xf32> to vector<8x16xf32>
    %3 = vector.broadcast %1 : vector<1x16xf32> to vector<8x16xf32>
    %4 = arith.mulf %2, %3 : vector<8x16xf32>
    %5 = math.sin %4 : vector<8x16xf32>
    %c0_3 = arith.constant 0 : index
    %c0_4 = arith.constant 0 : index
    %c0_5 = arith.constant 0 : index
    %6 = vector.load %arg3[%c0_3, %c0_4, %c0_5] : memref<8x2x16xf32, #tpu.memory_space<vmem>>, vector<8x1x16xf32>
    %7 = vector.shape_cast %6 : vector<8x1x16xf32> to vector<8x16xf32>
    %8 = vector.shape_cast %5 : vector<8x16xf32> to vector<8x1x16xf32>
    tpu.vector_store %arg3[%c0_3, %c0_4, %c0_5], %8 {strides = array<i32>} : memref<8x2x16xf32, #tpu.memory_space<vmem>>, vector<8x1x16xf32>,
    %9 = math.cos %4 : vector<8x16xf32>
    %c0_6 = arith.constant 0 : index
    %c1 = arith.constant 1 : index
    %c0_7 = arith.constant 0 : index
    %10 = vector.load %arg3[%c0_6, %c1, %c0_7] : memref<8x2x16xf32, #tpu.memory_space<vmem>>, vector<8x1x16xf32>
    %11 = vector.shape_cast %10 : vector<8x1x16xf32> to vector<8x16xf32>
    %12 = vector.shape_cast %9 : vector<8x16xf32> to vector<8x1x16xf32>
    tpu.vector_store %arg3[%c0_6, %c1, %c0_7], %12 {strides = array<i32>} : memref<8x2x16xf32, #tpu.memory_space<vmem>>, vector<8x1x16xf32>,
    return
  }
  func.func @transform_0(%arg0: i32) -> (i32, i32) {
    %c0_i32 = arith.constant 0 : i32
    %c0_i32_0 = arith.constant 0 : i32
    return %arg0, %c0_i32 : i32, i32
  }
  func.func @transform_1(%arg0: i32) -> (i32, i32) {
    %c0_i32 = arith.constant 0 : i32
    %c0_i32_0 = arith.constant 0 : i32
    %c0_i32_1 = arith.constant 0 : i32
    return %c0_i32, %c0_i32_0 : i32, i32
  }
  func.func @transform_2(%arg0: i32) -> (i32, i32, i32) {
    %c0_i32 = arith.constant 0 : i32
    %c0_i32_0 = arith.constant 0 : i32
    %c0_i32_1 = arith.constant 0 : i32
    return %arg0, %c0_i32, %c0_i32_0 : i32, i32, i32
  }
}

</mosaic_0001>

<llo_original>
// kernel: sinusoidal_pos_emb.1
$region0: #{sinusoidal_pos_emb.1}
  #allocation0 [shape = 'u32[]', space=smem, size = 0x4, offset = 0x4, fixed_abs, tag = 'smem constant byte address 0x4 - core index']
  #allocation1 [shape = 'u32[144,128]{1,0:T(1,128)}', space=vmem, size = 0x12000, scoped, tag = 'internal scratch']
  %s0 = inlined_call_operand.vmem [shape: f32[8,1], index: 0, kind: input, shape index: {}]
  %s1 = inlined_call_operand.vmem [shape: f32[1,16], index: 1, kind: input, shape index: {}]
  %s2 = inlined_call_operand.vmem [shape: f32[8,2,16], index: 2, kind: output, shape index: {}]
  %s3 = sld [smem:[#allocation0]]
  $region18: #{sinusoidal_pos_emb.1} parent=0
    _
  %s5 = ssub.s32 1, %s3
  %s6 = scalar_select 0, %s5, %s3
  // Predicated region
  $region2: #{sinusoidal_pos_emb.1} parent=0 // pred_check
    _
  $region3: #{sinusoidal_pos_emb.1} parent=0 // pred_check_branch
    %8 = sbr.rel (0) target = $region5
  $region4: #{sinusoidal_pos_emb.1} parent=0 // pred_region
    _
  $region5: #{sinusoidal_pos_emb.1} parent=0 // pred_fallthru
    _
  // Predicated region
  $region6: #{sinusoidal_pos_emb.1} parent=0 // pred_check
    _
  $region7: #{sinusoidal_pos_emb.1} parent=0 // pred_check_branch
    %10 = sbr.rel (0) target = $region9
  $region8: #{sinusoidal_pos_emb.1} parent=0 // pred_region
    _
  $region9: #{sinusoidal_pos_emb.1} parent=0 // pred_fallthru
    _
  %v11 = vld [vmem:[%s0] sm:$0xff]
  %v12 = vld [vmem:[%s1] sm:$0x1]
  %14 = vset.pattern.permute.xlu0 0
  %15 = vperm.xlu0 %14, %v11
  %v16 = vpop.permute.xlu0 %15
  %v19 = vlaneseq
  %v20 = vshrl.u32 %v19, 7
  %v21 = vsub.s32 0, %v20
  %v22 = vrot.slane %v12, %v21
  %v24 = vmul.f32 %v16, %v22
  %v25 = vand.u32 2147483647, %v24
  %vm26 = vcmp.le.f32.partialorder %v25, 0.7853982
  %vm27 = vcmp.lt.s32.totalorder %v24, 0
  %v28 = vand.u32 %v24, 2139095040
  %v29 = vshrl.u32 %v28, 23
  %v30 = vsub.s32 %v29, 127
  %v31 = vand.u32 2147483647, %v24
  %v32 = vand.u32 %v31, 8388607
  %v33 = vor.u32 %v32, 8388608
  %v34 = vsub.s32 0, %v33
  %v35 = vadd.s32 %v30, 1
  %vm36 = vcmp.gt.s32.totalorder %v35, 0
  %v37 = vsel %vm36, %v35, 0
  %v38 = vshrl.u32 %v37, 5
  %v39 = vand.u32 %v37, 31
  %v40 = vsub.s32 32, %v39
  %v41 = vshrl.u32 683565275, %v40
  %v42 = vshll.u32 683565275, %v39
  %v43 = vshrl.u32 2475754826, %v40
  %v44 = vor.u32 %v42, %v43
  %v45 = vshll.u32 2475754826, %v39
  %v46 = vshrl.u32 2131351028, %v40
  %v47 = vor.u32 %v45, %v46
  %v48 = vshll.u32 2131351028, %v39
  %v49 = vshrl.u32 2102212464, %v40
  %v50 = vor.u32 %v48, %v49
  %v51 = vshll.u32 2102212464, %v39
  %v52 = vshrl.u32 920167782, %v40
  %v53 = vor.u32 %v51, %v52
  %v54 = vshll.u32 920167782, %v39
  %v55 = vshrl.u32 1326507024, %v40
  %v56 = vor.u32 %v54, %v55
  %vm57 = vcmp.lt.s32.totalorder %v38, 1
  %vm58 = vcmp.lt.s32.totalorder %v38, 2
  %vm59 = vcmp.lt.s32.totalorder %v38, 3
  %vm60 = vcmp.lt.s32.totalorder %v38, 4
  %v61 = vsel %vm57, %v41, %v44
  %v62 = vsel %vm60, %v50, 2102212464
  %v63 = vsel %vm59, %v47, %v62
  %v64 = vsel %vm58, %v61, %v63
  %v65 = vsel %vm57, %v44, %v47
  %v66 = vsel %vm60, %v53, 920167782
  %v67 = vsel %vm59, %v50, %v66
  %v68 = vsel %vm58, %v65, %v67
  %v69 = vsel %vm57, %v47, %v50
  %v70 = vsel %vm60, %v56, 1326507024
  %v71 = vsel %vm59, %v53, %v70
  %v72 = vsel %vm58, %v69, %v71
  %v73 = vshll.u32 %v33, 8
  %v74 = vmul.u32.u64.compose %v73, %v72
  %v75 = vextract.low.u32 %v74
  %v76 = vextract.high.u32 %v74
  %v77 = vmul.u32.u64.compose %v73, %v68
  %v78 = vextract.low.u32 %v77
  %v79 = vextract.high.u32 %v77
  %v80 = vmul.u32 %v73, %v64
  %v81 = vadd.s32 %v76, %v78
  %vm82 = vc.u32 %v76, %v78
  %v83 = vadd.s32 %v79, 1
  %v84 = vsel %vm82, %v83, %v79
  %v85 = vadd.s32 %v80, %v84
  %v86 = vadd.s32 %v85, 536870912
  %v87 = vshrl.u32 %v86, 30
  %v88 = vshll.u32 %v87, 30
  %v89 = vsub.s32 %v85, %v88
  %vm90 = vcmp.lt.s32.totalorder %v89, 0
  %v91 = vsub.s32 0, %v89
  %v92 = vsel %vm90, %v91, %v89
  %v93 = vclz %v92
  %v94 = vsub.s32 %v93, 2
  %vm95 = vcmp.gt.s32.totalorder 0, %v94
  %v96 = vsel %vm95, 0, %v94
  %v97 = vsub.s32 32, %v96
  %v98 = vshll.u32 %v89, %v96
  %v99 = vshrl.u32 %v81, %v97
  %v100 = vor.u32 %v98, %v99
  %v101 = vsub.s32 4294967266, %v96
  %v102 = vadd.s32 %v101, 127
  %v103 = vshll.u32 %v102, 23
  %v104 = vor.u32 4788187, %v103
  %v105 = vand.u32 2147483647, %v104
  %v107 = vcvt.s32.f32 %v100
  %v108 = vmul.f32 %v107, %v105
  %v109 = vxor.u32 %v108, 2147483648
  %v110 = vsel %vm27, %v109, %v108
  %v111 = vsub.s32 4, %v87
  %v112 = vsel %vm27, %v111, %v87
  %v113 = vsel %vm26, %v24, %v110
  %v114 = vsel %vm26, 0, %v112
  %v115 = vcosq.f32.pop %v113
  %v116 = vsinq.f32.pop %v113
  %vm117 = vweird.f32 %v24
  %v118 = vadd.s32 %v114, 3
  %v119 = vand.u32 %v118, 3
  %vm120 = vcmp.lt.s32.totalorder %v119, 2
  %vm121 = vcmp.eq.s32.totalorder %v119, 0
  %v122 = vxor.u32 %v116, 2147483648
  %v123 = vsel %vm121, %v115, %v122
  %vm124 = vcmp.eq.s32.totalorder %v119, 2
  %v125 = vxor.u32 %v115, 2147483648
  %v126 = vsel %vm124, %v125, %v116
  %v127 = vsel %vm120, %v123, %v126
  %v128 = vsel %vm117, nan, %v127
  %v130 = vcombine.high %v128, %v128
  %v132 = vunpack.c.l.s4 1966171168
  %v133 = vunpack.c.0.s8 %v132
  %v134 = vlaneseq
  %v135 = vshrl.u32 %v134, 7
  %v136 = vsub.s32 %v133, %v135
  %v137 = vrot.slane %v128, %v136
  %v139 = vunpack.c.l.s4 1966171168
  %v140 = vunpack.c.0.s8 %v139
  %v141 = vlaneseq
  %v142 = vshrl.u32 %v141, 7
  %v143 = vsub.s32 %v140, %v142
  %v144 = vrot.slane %v130, %v143
  %v145 = vcombine.high %v137, %v137
  %v146 = vcombine.high %v144, %v144
  %v148 = vunpack.c.l.s4 1966171168
  %v149 = vunpack.c.0.s8 %v148
  %v150 = vlaneseq
  %v151 = vshrl.u32 %v150, 7
  %v152 = vsub.s32 %v149, %v151
  %v153 = vrot.slane %v137, %v152
  %v155 = vunpack.c.l.s4 1966171168
  %v156 = vunpack.c.0.s8 %v155
  %v157 = vlaneseq
  %v158 = vshrl.u32 %v157, 7
  %v159 = vsub.s32 %v156, %v158
  %v160 = vrot.slane %v144, %v159
  %v162 = vunpack.c.l.s4 1966171168
  %v163 = vunpack.c.0.s8 %v162
  %v164 = vlaneseq
  %v165 = vshrl.u32 %v164, 7
  %v166 = vsub.s32 %v163, %v165
  %v167 = vrot.slane %v145, %v166
  %v169 = vunpack.c.l.s4 1966171168
  %v170 = vunpack.c.0.s8 %v169
  %v171 = vlaneseq
  %v172 = vshrl.u32 %v171, 7
  %v173 = vsub.s32 %v170, %v172
  %v174 = vrot.slane %v146, %v173
  %v175 = vcombine.high %v153, %v153
  %v176 = vcombine.high %v160, %v160
  %v177 = vcombine.high %v167, %v167
  %v178 = vcombine.high %v174, %v174
  %vm187 = vcmask 122880
  %188 = vst.msk [vmem:[%s2] sm:$0x1] %vm187, %v153
  %189 = vst.msk [vmem:[%s2 + $0x2] sm:$0x1] %vm187, %v167
  %190 = vst.msk [vmem:[%s2 + $0x4] sm:$0x1] %vm187, %v175
  %191 = vst.msk [vmem:[%s2 + $0x6] sm:$0x1] %vm187, %v177
  %192 = vst.msk [vmem:[%s2 + $0x8] sm:$0x1] %vm187, %v160
  %193 = vst.msk [vmem:[%s2 + $0xa] sm:$0x1] %vm187, %v174
  %194 = vst.msk [vmem:[%s2 + $0xc] sm:$0x1] %vm187, %v176
  %195 = vst.msk [vmem:[%s2 + $0xe] sm:$0x1] %vm187, %v178
  %v196 = vand.u32 2147483647, %v24
  %vm197 = vcmp.le.f32.partialorder %v196, 0.7853982
  %vm198 = vcmp.lt.s32.totalorder %v24, 0
  %v199 = vand.u32 %v24, 2139095040
  %v200 = vshrl.u32 %v199, 23
  %v201 = vsub.s32 %v200, 127
  %v202 = vand.u32 2147483647, %v24
  %v203 = vand.u32 %v202, 8388607
  %v204 = vor.u32 %v203, 8388608
  %v205 = vsub.s32 0, %v204
  %v206 = vadd.s32 %v201, 1
  %vm207 = vcmp.gt.s32.totalorder %v206, 0
  %v208 = vsel %vm207, %v206, 0
  %v209 = vshrl.u32 %v208, 5
  %v210 = vand.u32 %v208, 31
  %v211 = vsub.s32 32, %v210
  %v212 = vshrl.u32 683565275, %v211
  %v213 = vshll.u32 683565275, %v210
  %v214 = vshrl.u32 2475754826, %v211
  %v215 = vor.u32 %v213, %v214
  %v216 = vshll.u32 2475754826, %v210
  %v217 = vshrl.u32 2131351028, %v211
  %v218 = vor.u32 %v216, %v217
  %v219 = vshll.u32 2131351028, %v210
  %v220 = vshrl.u32 2102212464, %v211
  %v221 = vor.u32 %v219, %v220
  %v222 = vshll.u32 2102212464, %v210
  %v223 = vshrl.u32 920167782, %v211
  %v224 = vor.u32 %v222, %v223
  %v225 = vshll.u32 920167782, %v210
  %v226 = vshrl.u32 1326507024, %v211
  %v227 = vor.u32 %v225, %v226
  %vm228 = vcmp.lt.s32.totalorder %v209, 1
  %vm229 = vcmp.lt.s32.totalorder %v209, 2
  %vm230 = vcmp.lt.s32.totalorder %v209, 3
  %vm231 = vcmp.lt.s32.totalorder %v209, 4
  %v232 = vsel %vm228, %v212, %v215
  %v233 = vsel %vm231, %v221, 2102212464
  %v234 = vsel %vm230, %v218, %v233
  %v235 = vsel %vm229, %v232, %v234
  %v236 = vsel %vm228, %v215, %v218
  %v237 = vsel %vm231, %v224, 920167782
  %v238 = vsel %vm230, %v221, %v237
  %v239 = vsel %vm229, %v236, %v238
  %v240 = vsel %vm228, %v218, %v221
  %v241 = vsel %vm231, %v227, 1326507024
  %v242 = vsel %vm230, %v224, %v241
  %v243 = vsel %vm229, %v240, %v242
  %v244 = vshll.u32 %v204, 8
  %v245 = vmul.u32.u64.compose %v244, %v243
  %v246 = vextract.low.u32 %v245
  %v247 = vextract.high.u32 %v245
  %v248 = vmul.u32.u64.compose %v244, %v239
  %v249 = vextract.low.u32 %v248
  %v250 = vextract.high.u32 %v248
  %v251 = vmul.u32 %v244, %v235
  %v252 = vadd.s32 %v247, %v249
  %vm253 = vc.u32 %v247, %v249
  %v254 = vadd.s32 %v250, 1
  %v255 = vsel %vm253, %v254, %v250
  %v256 = vadd.s32 %v251, %v255
  %v257 = vadd.s32 %v256, 536870912
  %v258 = vshrl.u32 %v257, 30
  %v259 = vshll.u32 %v258, 30
  %v260 = vsub.s32 %v256, %v259
  %vm261 = vcmp.lt.s32.totalorder %v260, 0
  %v262 = vsub.s32 0, %v260
  %v263 = vsel %vm261, %v262, %v260
  %v264 = vclz %v263
  %v265 = vsub.s32 %v264, 2
  %vm266 = vcmp.gt.s32.totalorder 0, %v265
  %v267 = vsel %vm266, 0, %v265
  %v268 = vsub.s32 32, %v267
  %v269 = vshll.u32 %v260, %v267
  %v270 = vshrl.u32 %v252, %v268
  %v271 = vor.u32 %v269, %v270
  %v272 = vsub.s32 4294967266, %v267
  %v273 = vadd.s32 %v272, 127
  %v274 = vshll.u32 %v273, 23
  %v275 = vor.u32 4788187, %v274
  %v276 = vand.u32 2147483647, %v275
  %v278 = vcvt.s32.f32 %v271
  %v279 = vmul.f32 %v278, %v276
  %v280 = vxor.u32 %v279, 2147483648
  %v281 = vsel %vm198, %v280, %v279
  %v282 = vsub.s32 4, %v258
  %v283 = vsel %vm198, %v282, %v258
  %v284 = vsel %vm197, %v24, %v281
  %v285 = vsel %vm197, 0, %v283
  %v286 = vcosq.f32.pop %v284
  %v287 = vsinq.f32.pop %v284
  %vm288 = vweird.f32 %v24
  %v289 = vand.u32 %v285, 3
  %vm290 = vcmp.lt.s32.totalorder %v289, 2
  %vm291 = vcmp.eq.s32.totalorder %v289, 0
  %v292 = vxor.u32 %v287, 2147483648
  %v293 = vsel %vm291, %v286, %v292
  %vm294 = vcmp.eq.s32.totalorder %v289, 2
  %v295 = vxor.u32 %v286, 2147483648
  %v296 = vsel %vm294, %v295, %v287
  %v297 = vsel %vm290, %v293, %v296
  %v298 = vsel %vm288, nan, %v297
  %v300 = vcombine.high %v298, %v298
  %v302 = vunpack.c.l.s4 1966171168
  %v303 = vunpack.c.0.s8 %v302
  %v304 = vlaneseq
  %v305 = vshrl.u32 %v304, 7
  %v306 = vsub.s32 %v303, %v305
  %v307 = vrot.slane %v298, %v306
  %v309 = vunpack.c.l.s4 1966171168
  %v310 = vunpack.c.0.s8 %v309
  %v311 = vlaneseq
  %v312 = vshrl.u32 %v311, 7
  %v313 = vsub.s32 %v310, %v312
  %v314 = vrot.slane %v300, %v313
  %v315 = vcombine.high %v307, %v307
  %v316 = vcombine.high %v314, %v314
  %v318 = vunpack.c.l.s4 1966171168
  %v319 = vunpack.c.0.s8 %v318
  %v320 = vlaneseq
  %v321 = vshrl.u32 %v320, 7
  %v322 = vsub.s32 %v319, %v321
  %v323 = vrot.slane %v307, %v322
  %v325 = vunpack.c.l.s4 1966171168
  %v326 = vunpack.c.0.s8 %v325
  %v327 = vlaneseq
  %v328 = vshrl.u32 %v327, 7
  %v329 = vsub.s32 %v326, %v328
  %v330 = vrot.slane %v314, %v329
  %v332 = vunpack.c.l.s4 1966171168
  %v333 = vunpack.c.0.s8 %v332
  %v334 = vlaneseq
  %v335 = vshrl.u32 %v334, 7
  %v336 = vsub.s32 %v333, %v335
  %v337 = vrot.slane %v315, %v336
  %v339 = vunpack.c.l.s4 1966171168
  %v340 = vunpack.c.0.s8 %v339
  %v341 = vlaneseq
  %v342 = vshrl.u32 %v341, 7
  %v343 = vsub.s32 %v340, %v342
  %v344 = vrot.slane %v316, %v343
  %v345 = vcombine.high %v323, %v323
  %v346 = vcombine.high %v330, %v330
  %v347 = vcombine.high %v337, %v337
  %v348 = vcombine.high %v344, %v344
  %357 = vst.msk [vmem:[%s2 + $0x1] sm:$0x1] %vm187, %v323
  %358 = vst.msk [vmem:[%s2 + $0x3] sm:$0x1] %vm187, %v337
  %359 = vst.msk [vmem:[%s2 + $0x5] sm:$0x1] %vm187, %v345
  %360 = vst.msk [vmem:[%s2 + $0x7] sm:$0x1] %vm187, %v347
  %361 = vst.msk [vmem:[%s2 + $0x9] sm:$0x1] %vm187, %v330
  %362 = vst.msk [vmem:[%s2 + $0xb] sm:$0x1] %vm187, %v344
  %363 = vst.msk [vmem:[%s2 + $0xd] sm:$0x1] %vm187, %v346
  %364 = vst.msk [vmem:[%s2 + $0xf] sm:$0x1] %vm187, %v348
  // Predicated region
  $region10: #{sinusoidal_pos_emb.1} parent=0 // pred_check
    _
  $region11: #{sinusoidal_pos_emb.1} parent=0 // pred_check_branch
    %366 = sbr.rel (0) target = $region13
  $region12: #{sinusoidal_pos_emb.1} parent=0 // pred_region
    _
  $region13: #{sinusoidal_pos_emb.1} parent=0 // pred_fallthru
    _
  // Predicated region
  $region14: #{sinusoidal_pos_emb.1} parent=0 // pred_check
    _
  $region15: #{sinusoidal_pos_emb.1} parent=0 // pred_check_branch
    %368 = sbr.rel (0) target = $region17
  $region16: #{sinusoidal_pos_emb.1} parent=0 // pred_region
    _
  $region17: #{sinusoidal_pos_emb.1} parent=0 // pred_fallthru
    _

</llo_original>
